<compile_context>
chip_gen: v5e
topology: v5e:2x2
jax: 0.10.0
libtpu: 0.0.40
codegen_flags: <defaults>
</compile_context>

<pallas_src>
import jax
import jax.numpy as jnp
from jax.experimental import pallas as pl
from jax.experimental.pallas import tpu as pltpu

LANE = 128  # lane width: decoder output channels are padded to this


# ---------------------------------------------------------------------------
# Single fused Pallas kernel: (lidar proj + camera proj) -> fuse -> decoder
# ---------------------------------------------------------------------------
def _bevfusion_kernel(x_ref,                 # [tile_m, CC_IN+CL_IN]  bf16
                      w1_ref, b1_ref,        # block-diag stage-1 (cam|lid)
                      wf_ref, bfu_ref,       # ConvFuser (stacked Wfc;Wfl)
                      wd_ref, bd_ref,        # decoder (lane-padded to 128)
                      out_ref):              # [tile_m, 128] bf16
    # stage 1: BOTH branch 1x1 convs as one block-diagonal matmul
    #   h1[:, :CC] = relu(cam @ Wc + bc),  h1[:, CC:] = relu(lid @ Wl + bl)
    h1 = jnp.dot(x_ref[...], w1_ref[...], preferred_element_type=jnp.float32)
    h1 = jnp.maximum(h1 + b1_ref[...], 0.0)

    # ConvFuser: relu(cat([cam, lid], ch) @ [Wfc; Wfl] + bf) as ONE K=C1 dot
    # (stage-1 output columns are already ordered [cam | lid]).
    fused = jnp.dot(h1.astype(wf_ref.dtype), wf_ref[...],
                    preferred_element_type=jnp.float32)
    fused = jnp.maximum(fused + bfu_ref[...], 0.0)

    # decoder head, weights zero-padded to LANE output columns ->
    # lane-dense unmasked store.
    dec = jnp.dot(fused.astype(wd_ref.dtype), wd_ref[...],
                  preferred_element_type=jnp.float32)
    out_ref[...] = (dec + bd_ref[...]).astype(out_ref.dtype)


def bevfusion_fused(x_rows, w, *, tile_m=None):
    """One pallas_call for the whole forward.  Returns bf16 [M, LANE] slab."""
    M, kin = x_rows.shape
    c1 = w["w1"].shape[1]
    cf = w["wf"].shape[1]

    if tile_m is None:
        # grid=(2,): the "parallel" row axis can shard across both TensorCores
        # on v7x; on single-TC v5e/v6e the extra pipeline step is ~0.35 us.
        tile_m = M // 2 if (M % 2 == 0 and (M // 2) % 8 == 0) else M
    assert M % tile_m == 0 and tile_m % 8 == 0

    def rows(i):    # row-tiled activations / output
        return (i, 0)

    def const(i):   # weights fully VMEM-resident across grid steps (no re-DMA)
        return (0, 0)

    full = lambda a: pl.BlockSpec(a.shape, const)

    nbytes = lambda a: a.size * a.dtype.itemsize
    bytes_accessed = (nbytes(x_rows)
                      + sum(nbytes(w[k]) for k in w)
                      + M * LANE * 2)                       # bf16 output slab
    flops = 2 * M * (kin * c1 + c1 * cf + cf * LANE)

    return pl.pallas_call(
        _bevfusion_kernel,
        out_shape=jax.ShapeDtypeStruct((M, LANE), jnp.bfloat16),
        grid_spec=pltpu.PrefetchScalarGridSpec(
            num_scalar_prefetch=0,
            grid=(M // tile_m,),
            in_specs=[
                pl.BlockSpec((tile_m, kin), rows),
                full(w["w1"]), full(w["b1"]),
                full(w["wf"]), full(w["bf"]),
                full(w["wd"]), full(w["bd"]),
            ],
            out_specs=pl.BlockSpec((tile_m, LANE), rows),
        ),
        compiler_params=pltpu.CompilerParams(
            dimension_semantics=("parallel",),
            vmem_limit_bytes=32 * 1024 * 1024,
        ),
        cost_estimate=pl.CostEstimate(
            flops=flops, transcendentals=0, bytes_accessed=bytes_accessed),
    )(x_rows, w["w1"], w["b1"], w["wf"], w["bf"], w["wd"], w["bd"])


# ---------------------------------------------------------------------------
# BevFusion wrapper (inference path of the PyTorch forward)
# ---------------------------------------------------------------------------
class BevFusionPallas:
    def __init__(self, params, n_cls, bev_h=16, bev_w=16):
        self.n_cls = n_cls
        self.bev_h = bev_h
        self.bev_w = bev_w

        cc_in, cc_out = params["cam_w"].shape
        cl_in, cl_out = params["lidar_w"].shape
        cf = params["dec_w"].shape[0]
        self.cc_in = cc_in

        # stage 1: block-diagonal weight, output columns ordered [cam | lid]
        w1 = jnp.zeros((cc_in + cl_in, cc_out + cl_out), jnp.float32)
        w1 = w1.at[:cc_in, :cc_out].set(params["cam_w"])
        w1 = w1.at[cc_in:, cc_out:].set(params["lidar_w"])
        b1 = jnp.concatenate([params["cam_b"], params["lidar_b"]], axis=1)

        # ConvFuser: cat([cam, lid]) @ [Wfc; Wfl]  ->  single stacked weight
        wf = jnp.concatenate([params["fuse_w_cam"], params["fuse_w_lid"]], axis=0)

        # decoder padded to LANE output columns -> lane-dense unmasked store
        wd = jnp.zeros((cf, LANE), jnp.float32).at[:, :n_cls].set(params["dec_w"])
        bd = jnp.zeros((1, LANE), jnp.float32).at[:, :n_cls].set(params["dec_b"])

        self.w = {
            "w1": w1.astype(jnp.bfloat16), "b1": b1,
            "wf": wf.astype(jnp.bfloat16), "bf": params["fuse_b"],
            "wd": wd.astype(jnp.bfloat16), "bd": bd,
        }

    def __call__(self, data):
        lidar = data["lidar_pseudo_image"]   # [B, CL_IN, H, W]
        img = data["img"]                    # [B, CC_IN, H, W]
        B, _, H, W = lidar.shape
        assert (H, W) == (self.bev_h, self.bev_w)
        # NOTE: in the reference, camera_feature is [B, H*W, C] and is
        # permute/reshape-ed to NCHW before concat; flattening back to
        # [B*H*W, C] rows makes that an identity, so no round-trip transposes.
        # TODO(synk): F.interpolate branch only triggers when the camera BEV
        # spatial size mismatches (bev_h, bev_w); it is a no-op at these shapes.

        # ONE NCHW->rows transpose on the channel-concatenated input
        # (camera channels first, matching cat([cx, lidar], dim=1)).
        x = jnp.concatenate([img, lidar], axis=1)
        x_rows = jnp.transpose(x, (0, 2, 3, 1)).reshape(B * H * W, -1)
        x_rows = x_rows.astype(jnp.bfloat16)

        # Entire forward (lidar net + camera net + ConvFuser + bev_decoder)
        # in one fused Pallas kernel; output is a lane-dense bf16 [M,128] slab.
        out_slab = bevfusion_fused(x_rows, self.w)

        # TODO(synk): at realistic BEV sizes (e.g. 180x180) pack 16 spatial
        # rows' n_cls channels into one 128-lane output row to cut the 16x
        # zero-lane writeback; unnecessary at M=512.
        dec_rows = out_slab[:, : self.n_cls].astype(jnp.float32)
        results = [jnp.transpose(dec_rows.reshape(B, H, W, self.n_cls),
                                 (0, 3, 1, 2))]
        return results


# ---------------------------------------------------------------------------
# Parameter construction (deterministic, synthetic)
# ---------------------------------------------------------------------------
def make_params(cl_in, cc_in, cl_out, cc_out, cf, n_cls):
    keys = jax.random.split(jax.random.PRNGKey(1), 9)
    s = 0.1
    return {
        "lidar_w": s * jax.random.normal(keys[0], (cl_in, cl_out), jnp.float32),
        "lidar_b": s * jax.random.normal(keys[1], (1, cl_out), jnp.float32),
        "cam_w": s * jax.random.normal(keys[2], (cc_in, cc_out), jnp.float32),
        "cam_b": s * jax.random.normal(keys[3], (1, cc_out), jnp.float32),
        # fuse conv weight for cat([camera, lidar]) split into two halves
        "fuse_w_cam": s * jax.random.normal(keys[4], (cc_out, cf), jnp.float32),
        "fuse_w_lid": s * jax.random.normal(keys[5], (cl_out, cf), jnp.float32),
        "fuse_b": s * jax.random.normal(keys[6], (1, cf), jnp.float32),
        "dec_w": s * jax.random.normal(keys[7], (cf, n_cls), jnp.float32),
        "dec_b": s * jax.random.normal(keys[8], (1, n_cls), jnp.float32),
    }


if __name__ == "__main__":
    B, bev_h, bev_w = 2, 16, 16
    CL_IN, CC_IN = 8, 8      # raw lidar pseudo-image / camera feature channels
    CL, CC = 16, 16          # lidar / camera BEV feature channels
    CF = 32                  # fused channels
    NCLS = 8                 # decoder output channels

    k0, k1 = jax.random.split(jax.random.PRNGKey(0))
    data = {
        "lidar_pseudo_image": jax.random.normal(
            k0, (B, CL_IN, bev_h, bev_w), jnp.float32),
        "img": jax.random.normal(k1, (B, CC_IN, bev_h, bev_w), jnp.float32),
    }

    params = make_params(CL_IN, CC_IN, CL, CC, CF, NCLS)
    model = BevFusionPallas(params, n_cls=NCLS, bev_h=bev_h, bev_w=bev_w)

    results = model(data)
    out = jax.block_until_ready(results[0])
    assert out.shape == (B, NCLS, bev_h, bev_w)
    assert bool(jnp.all(jnp.isfinite(out)))

    # pure-JAX reference of the same math (mirrors the kernel's bf16 rounding
    # of activations/weights with f32 accumulation)
    def ref_forward(d, p):
        bf16 = jnp.bfloat16

        def rows(x):
            b, c, h, w = x.shape
            return jnp.transpose(x, (0, 2, 3, 1)).reshape(b * h * w, c)

        cam_in = rows(d["img"]).astype(bf16)
        lid_in = rows(d["lidar_pseudo_image"]).astype(bf16)
        cam = jnp.maximum(
            jnp.dot(cam_in, p["cam_w"].astype(bf16),
                    preferred_element_type=jnp.float32) + p["cam_b"], 0.0)
        lid = jnp.maximum(
            jnp.dot(lid_in, p["lidar_w"].astype(bf16),
                    preferred_element_type=jnp.float32) + p["lidar_b"], 0.0)
        fused = jnp.maximum(
            jnp.dot(cam.astype(bf16), p["fuse_w_cam"].astype(bf16),
                    preferred_element_type=jnp.float32)
            + jnp.dot(lid.astype(bf16), p["fuse_w_lid"].astype(bf16),
                      preferred_element_type=jnp.float32)
            + p["fuse_b"], 0.0)
        dec = jnp.dot(fused.astype(bf16), p["dec_w"].astype(bf16),
                      preferred_element_type=jnp.float32) + p["dec_b"]
        return jnp.transpose(dec.reshape(B, bev_h, bev_w, NCLS), (0, 3, 1, 2))

    ref = ref_forward(data, params)
    assert bool(jnp.allclose(out, ref, atol=2e-2, rtol=2e-2)), (
        float(jnp.max(jnp.abs(out - ref))))

    print("KERNEL_OK")
</pallas_src>

<mosaic_0001>
module attributes {stable_mosaic.version = 11 : i64} {
  func.func @_bevfusion_kernel(%arg0: i32, %arg1: memref<256x16xbf16, #tpu.memory_space<vmem>>, %arg2: memref<16x32xbf16, #tpu.memory_space<vmem>>, %arg3: memref<1x32xf32, #tpu.memory_space<vmem>>, %arg4: memref<32x32xbf16, #tpu.memory_space<vmem>>, %arg5: memref<1x32xf32, #tpu.memory_space<vmem>>, %arg6: memref<32x128xbf16, #tpu.memory_space<vmem>>, %arg7: memref<1x128xf32, #tpu.memory_space<vmem>>, %arg8: memref<256x128xbf16, #tpu.memory_space<vmem>>) attributes {dimension_semantics = [#tpu.dimension_semantics<parallel>], iteration_bounds = array<i64: 2>, scalar_prefetch = 0 : i64, scratch_operands = 0 : i64, tpu.core_type = #tpu.core_type<tc>, window_params = [{transform_indices = @transform_0, window_bounds = array<i64: 256, 16>}, {pipeline_mode = #tpu.pipeline_mode<synchronous>, transform_indices = @transform_1, window_bounds = array<i64: 16, 32>}, {pipeline_mode = #tpu.pipeline_mode<synchronous>, transform_indices = @transform_2, window_bounds = array<i64: 1, 32>}, {pipeline_mode = #tpu.pipeline_mode<synchronous>, transform_indices = @transform_3, window_bounds = array<i64: 32, 32>}, {pipeline_mode = #tpu.pipeline_mode<synchronous>, transform_indices = @transform_4, window_bounds = array<i64: 1, 32>}, {pipeline_mode = #tpu.pipeline_mode<synchronous>, transform_indices = @transform_5, window_bounds = array<i64: 32, 128>}, {pipeline_mode = #tpu.pipeline_mode<synchronous>, transform_indices = @transform_6, window_bounds = array<i64: 1, 128>}, {transform_indices = @transform_7, window_bounds = array<i64: 256, 128>}]} {
    %c0 = arith.constant 0 : index
    %c0_0 = arith.constant 0 : index
    %0 = vector.load %arg1[%c0, %c0_0] : memref<256x16xbf16, #tpu.memory_space<vmem>>, vector<256x16xbf16>
    %c0_1 = arith.constant 0 : index
    %c0_2 = arith.constant 0 : index
    %1 = vector.load %arg2[%c0_1, %c0_2] : memref<16x32xbf16, #tpu.memory_space<vmem>>, vector<16x32xbf16>
    %cst = arith.constant dense<0.000000e+00> : vector<256x32xf32>
    %2 = tpu.matmul %0, %1, %cst {dimension_numbers = #tpu.dot_dimension_numbers<[1], [0], [0], [1], [0, 0, 1, 1], [], []>} : vector<256x16xbf16>, vector<16x32xbf16>, vector<256x32xf32> -> vector<256x32xf32>
    %c0_3 = arith.constant 0 : index
    %c0_4 = arith.constant 0 : index
    %3 = vector.load %arg3[%c0_3, %c0_4] : memref<1x32xf32, #tpu.memory_space<vmem>>, vector<1x32xf32>
    %4 = vector.broadcast %3 : vector<1x32xf32> to vector<256x32xf32>
    %5 = arith.addf %2, %4 : vector<256x32xf32>
    %cst_5 = arith.constant 0.000000e+00 : f32
    %6 = vector.broadcast %cst_5 : f32 to vector<256x32xf32>
    %7 = arith.maximumf %5, %6 : vector<256x32xf32>
    %8 = arith.truncf %7 : vector<256x32xf32> to vector<256x32xbf16>
    %c0_6 = arith.constant 0 : index
    %c0_7 = arith.constant 0 : index
    %9 = vector.load %arg4[%c0_6, %c0_7] : memref<32x32xbf16, #tpu.memory_space<vmem>>, vector<32x32xbf16>
    %cst_8 = arith.constant dense<0.000000e+00> : vector<256x32xf32>
    %10 = tpu.matmul %8, %9, %cst_8 {dimension_numbers = #tpu.dot_dimension_numbers<[1], [0], [0], [1], [0, 0, 1, 1], [], []>} : vector<256x32xbf16>, vector<32x32xbf16>, vector<256x32xf32> -> vector<256x32xf32>
    %c0_9 = arith.constant 0 : index
    %c0_10 = arith.constant 0 : index
    %11 = vector.load %arg5[%c0_9, %c0_10] : memref<1x32xf32, #tpu.memory_space<vmem>>, vector<1x32xf32>
    %12 = vector.broadcast %11 : vector<1x32xf32> to vector<256x32xf32>
    %13 = arith.addf %10, %12 : vector<256x32xf32>
    %cst_11 = arith.constant 0.000000e+00 : f32
    %14 = vector.broadcast %cst_11 : f32 to vector<256x32xf32>
    %15 = arith.maximumf %13, %14 : vector<256x32xf32>
    %16 = arith.truncf %15 : vector<256x32xf32> to vector<256x32xbf16>
    %c0_12 = arith.constant 0 : index
    %c0_13 = arith.constant 0 : index
    %17 = vector.load %arg6[%c0_12, %c0_13] : memref<32x128xbf16, #tpu.memory_space<vmem>>, vector<32x128xbf16>
    %cst_14 = arith.constant dense<0.000000e+00> : vector<256x128xf32>
    %18 = tpu.matmul %16, %17, %cst_14 {dimension_numbers = #tpu.dot_dimension_numbers<[1], [0], [0], [1], [0, 0, 1, 1], [], []>} : vector<256x32xbf16>, vector<32x128xbf16>, vector<256x128xf32> -> vector<256x128xf32>
    %c0_15 = arith.constant 0 : index
    %c0_16 = arith.constant 0 : index
    %19 = vector.load %arg7[%c0_15, %c0_16] : memref<1x128xf32, #tpu.memory_space<vmem>>, vector<1x128xf32>
    %20 = vector.broadcast %19 : vector<1x128xf32> to vector<256x128xf32>
    %21 = arith.addf %18, %20 : vector<256x128xf32>
    %22 = arith.truncf %21 : vector<256x128xf32> to vector<256x128xbf16>
    %c0_17 = arith.constant 0 : index
    %c0_18 = arith.constant 0 : index
    %23 = vector.load %arg8[%c0_17, %c0_18] : memref<256x128xbf16, #tpu.memory_space<vmem>>, vector<256x128xbf16>
    tpu.vector_store %arg8[%c0_17, %c0_18], %22 {strides = array<i32>} : memref<256x128xbf16, #tpu.memory_space<vmem>>, vector<256x128xbf16>,
    return
  }
  func.func @transform_0(%arg0: i32) -> (i32, i32) {
    %c0_i32 = arith.constant 0 : i32
    %c0_i32_0 = arith.constant 0 : i32
    return %arg0, %c0_i32 : i32, i32
  }
  func.func @transform_1(%arg0: i32) -> (i32, i32) {
    %c0_i32 = arith.constant 0 : i32
    %c0_i32_0 = arith.constant 0 : i32
    %c0_i32_1 = arith.constant 0 : i32
    return %c0_i32, %c0_i32_0 : i32, i32
  }
  func.func @transform_2(%arg0: i32) -> (i32, i32) {
    %c0_i32 = arith.constant 0 : i32
    %c0_i32_0 = arith.constant 0 : i32
    %c0_i32_1 = arith.constant 0 : i32
    return %c0_i32, %c0_i32_0 : i32, i32
  }
  func.func @transform_3(%arg0: i32) -> (i32, i32) {
    %c0_i32 = arith.constant 0 : i32
    %c0_i32_0 = arith.constant 0 : i32
    %c0_i32_1 = arith.constant 0 : i32
    return %c0_i32, %c0_i32_0 : i32, i32
  }
  func.func @transform_4(%arg0: i32) -> (i32, i32) {
    %c0_i32 = arith.constant 0 : i32
    %c0_i32_0 = arith.constant 0 : i32
    %c0_i32_1 = arith.constant 0 : i32
    return %c0_i32, %c0_i32_0 : i32, i32
  }
  func.func @transform_5(%arg0: i32) -> (i32, i32) {
    %c0_i32 = arith.constant 0 : i32
    %c0_i32_0 = arith.constant 0 : i32
    %c0_i32_1 = arith.constant 0 : i32
    return %c0_i32, %c0_i32_0 : i32, i32
  }
  func.func @transform_6(%arg0: i32) -> (i32, i32) {
    %c0_i32 = arith.constant 0 : i32
    %c0_i32_0 = arith.constant 0 : i32
    %c0_i32_1 = arith.constant 0 : i32
    return %c0_i32, %c0_i32_0 : i32, i32
  }
  func.func @transform_7(%arg0: i32) -> (i32, i32) {
    %c0_i32 = arith.constant 0 : i32
    %c0_i32_0 = arith.constant 0 : i32
    return %arg0, %c0_i32 : i32, i32
  }
}

</mosaic_0001>

<llo_original>
// kernel: tpu_custom_call.1
$region0: #{tpu_custom_call.1}
  #allocation0 [shape = 'u32[]', space=smem, size = 0x4, offset = 0x4, fixed_abs, tag = 'smem constant byte address 0x4 - core index']
  #allocation1 [shape = 'u32[72,128]{1,0:T(1,128)}', space=vmem, size = 0x9000, scoped, tag = 'internal scratch']
  %s0 = inlined_call_operand.vmem [shape: bf16[512,16], index: 0, kind: input, shape index: {}]
  %s1 = inlined_call_operand.vmem [shape: bf16[16,32], index: 1, kind: input, shape index: {}]
  %s2 = inlined_call_operand.vmem [shape: f32[1,32], index: 2, kind: input, shape index: {}]
  %s3 = inlined_call_operand.vmem [shape: bf16[32,32], index: 3, kind: input, shape index: {}]
  %s4 = inlined_call_operand.vmem [shape: f32[1,32], index: 4, kind: input, shape index: {}]
  %s5 = inlined_call_operand.vmem [shape: bf16[32,128], index: 5, kind: input, shape index: {}]
  %s6 = inlined_call_operand.vmem [shape: f32[1,128], index: 6, kind: input, shape index: {}]
  %s7 = inlined_call_operand.hbm [shape: bf16[512,128], index: 7, kind: output, shape index: {}]
  %s8 = sld [smem:[#allocation0]]
  $region61: #{tpu_custom_call.1} parent=0
    _
  %s10 = ssub.s32 1, %s8
  %s11 = scalar_select 0, %s10, %s8
  $region1: #{tpu_custom_call.1} parent=0
    #allocation2 [shape = 'u8[131072]{0}', space=vmem, size = 0x20000, scoped, tag = 'output window, operand 0']
    #allocation3 [shape = 's32[2]{0}', space=sflag, size = 0x8, scoped, tag = 'scoped memory for tpu_custom_call.1']
    %12 = vsyncpa [#allocation3], 0
    %s13 = scalar_lea.sflag [#allocation3], 1
    %14 = vsyncpa %s13, 0
    loop: start=0, step=1, limit=4
    $region2: #{tpu_custom_call.1} parent=1 // loop_pre_header
      _
    $region3: #{tpu_custom_call.1} parent=1 // loop_header
      %s16 = sphi 0, %s20
      %p17 = scmp.ge.s32.totalorder %s16, 4
      %s26 = sphi 0, %s28
      %s29 = sphi 0, %s26
      %s30 = sphi 0, %s29
      %s46 = sphi 0, %s30
      %s50 = sphi 0, %s50
      %s52 = sphi 0, %s50
      %s53 = sphi 0, %s52
      %s67 = sphi 0, %s53
      %s71 = sphi 0, %s71
      %s73 = sphi 0, %s71
      %s74 = sphi 0, %s73
      %s88 = sphi 0, %s74
      %s92 = sphi 0, %s92
      %s94 = sphi 0, %s92
      %s95 = sphi 0, %s94
      %s109 = sphi 0, %s95
      %s113 = sphi 0, %s113
      %s115 = sphi 0, %s113
      %s116 = sphi 0, %s115
      %s130 = sphi 0, %s116
      %s134 = sphi 0, %s134
      %s136 = sphi 0, %s134
      %s137 = sphi 0, %s136
      %s151 = sphi 0, %s137
      %s155 = sphi 0, %s155
      %s157 = sphi 0, %s155
      %s158 = sphi 0, %s157
      %s172 = sphi 0, %s158
      %s178 = sphi 0, %s180
      %s181 = sphi 0, %s178
      %s182 = sphi 0, %s181
      %s198 = sphi 0, %s182
    $region4: #{tpu_custom_call.1} parent=1 // loop_header_branch
      %19 = sbr.rel (%p17) target = $region8
    $region5: #{tpu_custom_call.1} parent=1 // loop_body
      %s21 = ssub.s32 %s16, 1
      %s22 = ssub.s32 %s16, 2
      %s23 = sadd.s32 %s16, 1
      %s24 = ssub.s32 %s16, %s23
      %p25 = scmp.eq.s32.totalorder %s24, 0
      %s27 = sadd.s32 %s26, 1
      %s28 = scalar_select %p25, %s26, %s27
      %p31 = pneg %p25
      %p32 = scmp.eq.s32.totalorder %s16, 1
      %p33 = por %p31, %p32
      %p34 = scmp.ne.s32.totalorder %s26, %s29
      %p35 = scmp.eq.s32.totalorder %s16, 0
      %p36 = por %p34, %p35
      %p37 = scmp.ne.s32.totalorder %s26, %s29
      %p38 = scmp.eq.s32.totalorder %s21, 1
      %p39 = por %p37, %p38
      %p40 = scmp.ne.s32.totalorder %s29, %s30
      %p41 = scmp.eq.s32.totalorder %s21, 0
      %p42 = por %p40, %p41
      %p43 = scmp.ne.s32.totalorder %s29, %s30
      %p44 = scmp.eq.s32.totalorder %s22, 1
      %p45 = por %p43, %p44
      %p47 = scmp.ne.s32.totalorder %s30, %s46
      %p48 = scmp.eq.s32.totalorder %s22, 0
      %p49 = por %p47, %p48
      %s51 = sadd.s32 %s50, 1
      %p54 = scmp.eq.s32.totalorder %s16, 1
      %p55 = scmp.ne.s32.totalorder %s50, %s52
      %p56 = scmp.eq.s32.totalorder %s16, 0
      %p57 = por %p55, %p56
      %p58 = scmp.ne.s32.totalorder %s50, %s52
      %p59 = scmp.eq.s32.totalorder %s21, 1
      %p60 = por %p58, %p59
      %p61 = scmp.ne.s32.totalorder %s52, %s53
      %p62 = scmp.eq.s32.totalorder %s21, 0
      %p63 = por %p61, %p62
      %p64 = scmp.ne.s32.totalorder %s52, %s53
      %p65 = scmp.eq.s32.totalorder %s22, 1
      %p66 = por %p64, %p65
      %p68 = scmp.ne.s32.totalorder %s53, %s67
      %p69 = scmp.eq.s32.totalorder %s22, 0
      %p70 = por %p68, %p69
      %s72 = sadd.s32 %s71, 1
      %p75 = scmp.eq.s32.totalorder %s16, 1
      %p76 = scmp.ne.s32.totalorder %s71, %s73
      %p77 = scmp.eq.s32.totalorder %s16, 0
      %p78 = por %p76, %p77
      %p79 = scmp.ne.s32.totalorder %s71, %s73
      %p80 = scmp.eq.s32.totalorder %s21, 1
      %p81 = por %p79, %p80
      %p82 = scmp.ne.s32.totalorder %s73, %s74
      %p83 = scmp.eq.s32.totalorder %s21, 0
      %p84 = por %p82, %p83
      %p85 = scmp.ne.s32.totalorder %s73, %s74
      %p86 = scmp.eq.s32.totalorder %s22, 1
      %p87 = por %p85, %p86
      %p89 = scmp.ne.s32.totalorder %s74, %s88
      %p90 = scmp.eq.s32.totalorder %s22, 0
      %p91 = por %p89, %p90
      %s93 = sadd.s32 %s92, 1
      %p96 = scmp.eq.s32.totalorder %s16, 1
      %p97 = scmp.ne.s32.totalorder %s92, %s94
      %p98 = scmp.eq.s32.totalorder %s16, 0
      %p99 = por %p97, %p98
      %p100 = scmp.ne.s32.totalorder %s92, %s94
      %p101 = scmp.eq.s32.totalorder %s21, 1
      %p102 = por %p100, %p101
      %p103 = scmp.ne.s32.totalorder %s94, %s95
      %p104 = scmp.eq.s32.totalorder %s21, 0
      %p105 = por %p103, %p104
      %p106 = scmp.ne.s32.totalorder %s94, %s95
      %p107 = scmp.eq.s32.totalorder %s22, 1
      %p108 = por %p106, %p107
      %p110 = scmp.ne.s32.totalorder %s95, %s109
      %p111 = scmp.eq.s32.totalorder %s22, 0
      %p112 = por %p110, %p111
      %s114 = sadd.s32 %s113, 1
      %p117 = scmp.eq.s32.totalorder %s16, 1
      %p118 = scmp.ne.s32.totalorder %s113, %s115
      %p119 = scmp.eq.s32.totalorder %s16, 0
      %p120 = por %p118, %p119
      %p121 = scmp.ne.s32.totalorder %s113, %s115
      %p122 = scmp.eq.s32.totalorder %s21, 1
      %p123 = por %p121, %p122
      %p124 = scmp.ne.s32.totalorder %s115, %s116
      %p125 = scmp.eq.s32.totalorder %s21, 0
      %p126 = por %p124, %p125
      %p127 = scmp.ne.s32.totalorder %s115, %s116
      %p128 = scmp.eq.s32.totalorder %s22, 1
      %p129 = por %p127, %p128
      %p131 = scmp.ne.s32.totalorder %s116, %s130
      %p132 = scmp.eq.s32.totalorder %s22, 0
      %p133 = por %p131, %p132
      %s135 = sadd.s32 %s134, 1
      %p138 = scmp.eq.s32.totalorder %s16, 1
      %p139 = scmp.ne.s32.totalorder %s134, %s136
      %p140 = scmp.eq.s32.totalorder %s16, 0
      %p141 = por %p139, %p140
      %p142 = scmp.ne.s32.totalorder %s134, %s136
      %p143 = scmp.eq.s32.totalorder %s21, 1
      %p144 = por %p142, %p143
      %p145 = scmp.ne.s32.totalorder %s136, %s137
      %p146 = scmp.eq.s32.totalorder %s21, 0
      %p147 = por %p145, %p146
      %p148 = scmp.ne.s32.totalorder %s136, %s137
      %p149 = scmp.eq.s32.totalorder %s22, 1
      %p150 = por %p148, %p149
      %p152 = scmp.ne.s32.totalorder %s137, %s151
      %p153 = scmp.eq.s32.totalorder %s22, 0
      %p154 = por %p152, %p153
      %s156 = sadd.s32 %s155, 1
      %p159 = scmp.eq.s32.totalorder %s16, 1
      %p160 = scmp.ne.s32.totalorder %s155, %s157
      %p161 = scmp.eq.s32.totalorder %s16, 0
      %p162 = por %p160, %p161
      %p163 = scmp.ne.s32.totalorder %s155, %s157
      %p164 = scmp.eq.s32.totalorder %s21, 1
      %p165 = por %p163, %p164
      %p166 = scmp.ne.s32.totalorder %s157, %s158
      %p167 = scmp.eq.s32.totalorder %s21, 0
      %p168 = por %p166, %p167
      %p169 = scmp.ne.s32.totalorder %s157, %s158
      %p170 = scmp.eq.s32.totalorder %s22, 1
      %p171 = por %p169, %p170
      %p173 = scmp.ne.s32.totalorder %s158, %s172
      %p174 = scmp.eq.s32.totalorder %s22, 0
      %p175 = por %p173, %p174
      %s176 = ssub.s32 %s16, %s23
      %p177 = scmp.eq.s32.totalorder %s176, 0
      %s179 = sadd.s32 %s178, 1
      %s180 = scalar_select %p177, %s178, %s179
      %p183 = pneg %p177
      %p184 = scmp.eq.s32.totalorder %s16, 1
      %p185 = por %p183, %p184
      %p186 = scmp.ne.s32.totalorder %s178, %s181
      %p187 = scmp.eq.s32.totalorder %s16, 0
      %p188 = por %p186, %p187
      %p189 = scmp.ne.s32.totalorder %s178, %s181
      %p190 = scmp.eq.s32.totalorder %s21, 1
      %p191 = por %p189, %p190
      %p192 = scmp.ne.s32.totalorder %s181, %s182
      %p193 = scmp.eq.s32.totalorder %s21, 0
      %p194 = por %p192, %p193
      %p195 = scmp.ne.s32.totalorder %s181, %s182
      %p196 = scmp.eq.s32.totalorder %s22, 1
      %p197 = por %p195, %p196
      %p199 = scmp.ne.s32.totalorder %s182, %s198
      %p200 = scmp.eq.s32.totalorder %s22, 0
      %p201 = por %p199, %p200
      %p202 = scmp.le.s32.totalorder 1, %s16
      %p203 = scmp.lt.s32.totalorder %s16, 3
      %p204 = pnand %p202, %p203
      %p205 = pneg %p204
      // Predicated region
      $region9: #{tpu_custom_call.1} parent=5 // pred_check
        _
      $region10: #{tpu_custom_call.1} parent=5 // pred_check_branch
        %207 = sbr.rel (%p204) target = $region12
      $region11: #{tpu_custom_call.1} parent=5 // pred_region
        %s208 = ssub.s32 %s16, 1
        // Predicated region
        $region13: #{tpu_custom_call.1} parent=11 // pred_check
          %p209 = pneg %p63
        $region14: #{tpu_custom_call.1} parent=11 // pred_check_branch
          %211 = sbr.rel (%p209) target = $region16
        $region15: #{tpu_custom_call.1} parent=11 // pred_region
          _
        $region16: #{tpu_custom_call.1} parent=11 // pred_fallthru
          _
        // Predicated region
        $region17: #{tpu_custom_call.1} parent=11 // pred_check
          %p212 = pneg %p84
        $region18: #{tpu_custom_call.1} parent=11 // pred_check_branch
          %214 = sbr.rel (%p212) target = $region20
        $region19: #{tpu_custom_call.1} parent=11 // pred_region
          _
        $region20: #{tpu_custom_call.1} parent=11 // pred_fallthru
          _
        // Predicated region
        $region21: #{tpu_custom_call.1} parent=11 // pred_check
          %p215 = pneg %p105
        $region22: #{tpu_custom_call.1} parent=11 // pred_check_branch
          %217 = sbr.rel (%p215) target = $region24
        $region23: #{tpu_custom_call.1} parent=11 // pred_region
          _
        $region24: #{tpu_custom_call.1} parent=11 // pred_fallthru
          _
        // Predicated region
        $region25: #{tpu_custom_call.1} parent=11 // pred_check
          %p218 = pneg %p126
        $region26: #{tpu_custom_call.1} parent=11 // pred_check_branch
          %220 = sbr.rel (%p218) target = $region28
        $region27: #{tpu_custom_call.1} parent=11 // pred_region
          _
        $region28: #{tpu_custom_call.1} parent=11 // pred_fallthru
          _
        // Predicated region
        $region29: #{tpu_custom_call.1} parent=11 // pred_check
          %p221 = pneg %p147
        $region30: #{tpu_custom_call.1} parent=11 // pred_check_branch
          %223 = sbr.rel (%p221) target = $region32
        $region31: #{tpu_custom_call.1} parent=11 // pred_region
          _
        $region32: #{tpu_custom_call.1} parent=11 // pred_fallthru
          _
        // Predicated region
        $region33: #{tpu_custom_call.1} parent=11 // pred_check
          %p224 = pneg %p168
        $region34: #{tpu_custom_call.1} parent=11 // pred_check_branch
          %226 = sbr.rel (%p224) target = $region36
        $region35: #{tpu_custom_call.1} parent=11 // pred_region
          _
        $region36: #{tpu_custom_call.1} parent=11 // pred_fallthru
          _
      $region12: #{tpu_custom_call.1} parent=5 // pred_fallthru
        _
      %p227 = scmp.lt.s32.totalorder %s16, 2
      // Predicated region
      $region37: #{tpu_custom_call.1} parent=5 // pred_check
        %p228 = pneg %p227
      $region38: #{tpu_custom_call.1} parent=5 // pred_check_branch
        %230 = sbr.rel (%p228) target = $region40
      $region39: #{tpu_custom_call.1} parent=5 // pred_region
        // Predicated region
        $region41: #{tpu_custom_call.1} parent=39 // pred_check
          %p231 = pneg %p36
        $region42: #{tpu_custom_call.1} parent=39 // pred_check_branch
          %233 = sbr.rel (%p231) target = $region44
        $region43: #{tpu_custom_call.1} parent=39 // pred_region
          %s234 = smul.u32 32, %s16
          %p235 = scmp.lt.s32.totalorder %s234, 63
          %s236 = scalar_select %p235, %s234, 63
          %s237 = smul.addr %s236, 4
          %s238 = scalar_lea.vmem %s0, %s237
          %s239 = smul.u32 32, %s16
        $region44: #{tpu_custom_call.1} parent=39 // pred_fallthru
          _
      $region40: #{tpu_custom_call.1} parent=5 // pred_fallthru
        _
      %p240 = scmp.le.s32.totalorder 1, %s16
      %p241 = scmp.lt.s32.totalorder %s16, 3
      %p242 = pnand %p240, %p241
      %p243 = pneg %p242
      // Predicated region
      $region45: #{tpu_custom_call.1} parent=5 // pred_check
        _
      $region46: #{tpu_custom_call.1} parent=5 // pred_check_branch
        %245 = sbr.rel (%p242) target = $region48
      $region47: #{tpu_custom_call.1} parent=5 // pred_region
        %s246 = ssub.s32 %s16, 1
        %s247 = smul.u32 32, %s21
        %p248 = scmp.lt.s32.totalorder %s247, 63
        %s249 = scalar_select %p248, %s247, 63
        %s250 = smul.addr %s249, 4
        %s251 = scalar_lea.vmem %s0, %s250
        %p252 = pneg %p42
        %p253 = pneg %p39
        %p254 = pneg %p63
        %p255 = pneg %p60
        %p256 = pneg %p84
        %p257 = pneg %p81
        %p258 = pneg %p105
        %p259 = pneg %p102
        %p260 = pneg %p126
        %p261 = pneg %p123
        %p262 = pneg %p147
        %p263 = pneg %p144
        %p264 = pneg %p168
        %p265 = pneg %p165
        %p266 = pneg %p194
        %p267 = pneg %p191
        %s268 = sand.u32 %s181, 1
        %s269 = scalar_lea.sflag [#allocation3], %s268
        %s270 = sand.u32 %s181, 1
        %s271 = smul.addr %s270, 128
        %s272 = scalar_lea.vmem [#allocation2], %s271
        %s273 = smul.u32 32, %s21
        %p274 = scmp.lt.s32.totalorder %s273, 63
        %s275 = scalar_select %p274, %s273, 63
        %s276 = smul.addr %s275, 4
        %s277 = scalar_lea.vmem %s0, %s276
        %s278 = smul.u32 32, %s21
        %s279 = smul.u32 32, %s21
        %v281 = vld [vmem:[%s277] sm:$0xf]
        %v282 = vld [vmem:[%s277 + $0x4] sm:$0xf]
        %v283 = vld [vmem:[%s277 + $0x8] sm:$0xf]
        %v284 = vld [vmem:[%s277 + $0xc] sm:$0xf]
        %v285 = vld [vmem:[%s277 + $0x10] sm:$0xf]
        %v286 = vld [vmem:[%s277 + $0x14] sm:$0xf]
        %v287 = vld [vmem:[%s277 + $0x18] sm:$0xf]
        %v288 = vld [vmem:[%s277 + $0x1c] sm:$0xf]
        %v289 = vld [vmem:[%s277 + $0x20] sm:$0xf]
        %v290 = vld [vmem:[%s277 + $0x24] sm:$0xf]
        %v291 = vld [vmem:[%s277 + $0x28] sm:$0xf]
        %v292 = vld [vmem:[%s277 + $0x2c] sm:$0xf]
        %v293 = vld [vmem:[%s277 + $0x30] sm:$0xf]
        %v294 = vld [vmem:[%s277 + $0x34] sm:$0xf]
        %v295 = vld [vmem:[%s277 + $0x38] sm:$0xf]
        %v296 = vld [vmem:[%s277 + $0x3c] sm:$0xf]
        %v297 = vld [vmem:[%s277 + $0x40] sm:$0xf]
        %v298 = vld [vmem:[%s277 + $0x44] sm:$0xf]
        %v299 = vld [vmem:[%s277 + $0x48] sm:$0xf]
        %v300 = vld [vmem:[%s277 + $0x4c] sm:$0xf]
        %v301 = vld [vmem:[%s277 + $0x50] sm:$0xf]
        %v302 = vld [vmem:[%s277 + $0x54] sm:$0xf]
        %v303 = vld [vmem:[%s277 + $0x58] sm:$0xf]
        %v304 = vld [vmem:[%s277 + $0x5c] sm:$0xf]
        %v305 = vld [vmem:[%s277 + $0x60] sm:$0xf]
        %v306 = vld [vmem:[%s277 + $0x64] sm:$0xf]
        %v307 = vld [vmem:[%s277 + $0x68] sm:$0xf]
        %v308 = vld [vmem:[%s277 + $0x6c] sm:$0xf]
        %v309 = vld [vmem:[%s277 + $0x70] sm:$0xf]
        %v310 = vld [vmem:[%s277 + $0x74] sm:$0xf]
        %v311 = vld [vmem:[%s277 + $0x78] sm:$0xf]
        %v312 = vld [vmem:[%s277 + $0x7c] sm:$0xf]
        %v313 = vld [vmem:[%s1] sm:$0xf]
        %v314 = vld [vmem:[%s1 + $0x4] sm:$0xf]
        %v315 = vld [vmem:[%s2] sm:$0x1]
        %v317 = vperm.slane %v315, 0
        %v351 = vunpack.c.l.b16 %v281
        %v352 = vunpack.c.l.b16 %v282
        %v353 = vunpack.c.l.b16 %v283
        %v354 = vunpack.c.l.b16 %v284
        %v355 = vunpack.c.l.b16 %v285
        %v356 = vunpack.c.l.b16 %v286
        %v357 = vunpack.c.l.b16 %v287
        %v358 = vunpack.c.l.b16 %v288
        %v359 = vunpack.c.l.b16 %v289
        %v360 = vunpack.c.l.b16 %v290
        %v361 = vunpack.c.l.b16 %v291
        %v362 = vunpack.c.l.b16 %v292
        %v363 = vunpack.c.l.b16 %v293
        %v364 = vunpack.c.l.b16 %v294
        %v365 = vunpack.c.l.b16 %v295
        %v366 = vunpack.c.l.b16 %v296
        %v367 = vunpack.c.l.b16 %v297
        %v368 = vunpack.c.l.b16 %v298
        %v369 = vunpack.c.l.b16 %v299
        %v370 = vunpack.c.l.b16 %v300
        %v371 = vunpack.c.l.b16 %v301
        %v372 = vunpack.c.l.b16 %v302
        %v373 = vunpack.c.l.b16 %v303
        %v374 = vunpack.c.l.b16 %v304
        %v375 = vunpack.c.l.b16 %v305
        %v376 = vunpack.c.l.b16 %v306
        %v377 = vunpack.c.l.b16 %v307
        %v378 = vunpack.c.l.b16 %v308
        %v379 = vunpack.c.l.b16 %v309
        %v380 = vunpack.c.l.b16 %v310
        %v381 = vunpack.c.l.b16 %v311
        %v382 = vunpack.c.l.b16 %v312
        %v383 = vpack.c.b16 %v352, %v351
        %v384 = vpack.c.b16 %v354, %v353
        %v385 = vpack.c.b16 %v356, %v355
        %v386 = vpack.c.b16 %v358, %v357
        %v387 = vpack.c.b16 %v360, %v359
        %v388 = vpack.c.b16 %v362, %v361
        %v389 = vpack.c.b16 %v364, %v363
        %v390 = vpack.c.b16 %v366, %v365
        %v391 = vpack.c.b16 %v368, %v367
        %v392 = vpack.c.b16 %v370, %v369
        %v393 = vpack.c.b16 %v372, %v371
        %v394 = vpack.c.b16 %v374, %v373
        %v395 = vpack.c.b16 %v376, %v375
        %v396 = vpack.c.b16 %v378, %v377
        %v397 = vpack.c.b16 %v380, %v379
        %v398 = vpack.c.b16 %v382, %v381
        %v401 = vunpack.c.l.b16 %v313
        %v402 = vunpack.c.l.b16 %v314
        %v403 = vpack.c.b16 %v402, %v401
        %vm405 = vcmask 130048
        %v407 = vsel %vm405, %v383, 0
        %v410 = vsel %vm405, %v384, 0
        %v413 = vsel %vm405, %v385, 0
        %v416 = vsel %vm405, %v386, 0
        %v419 = vsel %vm405, %v387, 0
        %v422 = vsel %vm405, %v388, 0
        %v425 = vsel %vm405, %v389, 0
        %v428 = vsel %vm405, %v390, 0
        %v431 = vsel %vm405, %v391, 0
        %v434 = vsel %vm405, %v392, 0
        %v437 = vsel %vm405, %v393, 0
        %v440 = vsel %vm405, %v394, 0
        %v443 = vsel %vm405, %v395, 0
        %v446 = vsel %vm405, %v396, 0
        %v449 = vsel %vm405, %v397, 0
        %v452 = vsel %vm405, %v398, 0
        %454 = vmatpush.bf16.msra.mxu0 0
        %455 = vmatpush.bf16.msra.mxu0 0
        %456 = vmatpush.bf16.msra.mxu0 0
        %457 = vmatpush.bf16.msra.mxu0 0
        %458 = vmatpush.bf16.msra.mxu0 0
        %459 = vmatpush.bf16.msra.mxu0 0
        %460 = vmatpush.bf16.msra.mxu0 0
        %461 = vmatpush.bf16.msra.mxu0 %v403
        %462 = vmatmul.bf16.gmra.mxu0 %v407
        %v463 = vpop.f32.mrf.mxu0
        %v464 = vadd.f32 %v317, %v463
        %v465 = vpop.f32.mrf.mxu0
        %v466 = vadd.f32 %v317, %v465
        %467 = vmatmul.bf16.gmra.mxu0 %v410
        %v468 = vpop.f32.mrf.mxu0
        %v469 = vadd.f32 %v317, %v468
        %v470 = vpop.f32.mrf.mxu0
        %v471 = vadd.f32 %v317, %v470
        %472 = vmatmul.bf16.gmra.mxu0 %v413
        %v473 = vpop.f32.mrf.mxu0
        %v474 = vadd.f32 %v317, %v473
        %v475 = vpop.f32.mrf.mxu0
        %v476 = vadd.f32 %v317, %v475
        %477 = vmatmul.bf16.gmra.mxu0 %v416
        %v478 = vpop.f32.mrf.mxu0
        %v479 = vadd.f32 %v317, %v478
        %v480 = vpop.f32.mrf.mxu0
        %v481 = vadd.f32 %v317, %v480
        %482 = vmatmul.bf16.gmra.mxu0 %v419
        %v483 = vpop.f32.mrf.mxu0
        %v484 = vadd.f32 %v317, %v483
        %v485 = vpop.f32.mrf.mxu0
        %v486 = vadd.f32 %v317, %v485
        %487 = vmatmul.bf16.gmra.mxu0 %v422
        %v488 = vpop.f32.mrf.mxu0
        %v489 = vadd.f32 %v317, %v488
        %v490 = vpop.f32.mrf.mxu0
        %v491 = vadd.f32 %v317, %v490
        %492 = vmatmul.bf16.gmra.mxu0 %v425
        %v493 = vpop.f32.mrf.mxu0
        %v494 = vadd.f32 %v317, %v493
        %v495 = vpop.f32.mrf.mxu0
        %v496 = vadd.f32 %v317, %v495
        %497 = vmatmul.bf16.gmra.mxu0 %v428
        %v498 = vpop.f32.mrf.mxu0
        %v499 = vadd.f32 %v317, %v498
        %v500 = vpop.f32.mrf.mxu0
        %v501 = vadd.f32 %v317, %v500
        %502 = vmatmul.bf16.gmra.mxu0 %v431
        %v503 = vpop.f32.mrf.mxu0
        %v504 = vadd.f32 %v317, %v503
        %v505 = vpop.f32.mrf.mxu0
        %v506 = vadd.f32 %v317, %v505
        %507 = vmatmul.bf16.gmra.mxu0 %v434
        %v508 = vpop.f32.mrf.mxu0
        %v509 = vadd.f32 %v317, %v508
        %v510 = vpop.f32.mrf.mxu0
        %v511 = vadd.f32 %v317, %v510
        %512 = vmatmul.bf16.gmra.mxu0 %v437
        %v513 = vpop.f32.mrf.mxu0
        %v514 = vadd.f32 %v317, %v513
        %v515 = vpop.f32.mrf.mxu0
        %v516 = vadd.f32 %v317, %v515
        %517 = vmatmul.bf16.gmra.mxu0 %v440
        %v518 = vpop.f32.mrf.mxu0
        %v519 = vadd.f32 %v317, %v518
        %v520 = vpop.f32.mrf.mxu0
        %v521 = vadd.f32 %v317, %v520
        %522 = vmatmul.bf16.gmra.mxu0 %v443
        %v523 = vpop.f32.mrf.mxu0
        %v524 = vadd.f32 %v317, %v523
        %v525 = vpop.f32.mrf.mxu0
        %v526 = vadd.f32 %v317, %v525
        %527 = vmatmul.bf16.gmra.mxu0 %v446
        %v528 = vpop.f32.mrf.mxu0
        %v529 = vadd.f32 %v317, %v528
        %v530 = vpop.f32.mrf.mxu0
        %v531 = vadd.f32 %v317, %v530
        %532 = vmatmul.bf16.gmra.mxu0 %v449
        %v533 = vpop.f32.mrf.mxu0
        %v534 = vadd.f32 %v317, %v533
        %v535 = vpop.f32.mrf.mxu0
        %v536 = vadd.f32 %v317, %v535
        %537 = vmatmul.bf16.gmra.mxu0 %v452
        %v538 = vpop.f32.mrf.mxu0
        %v539 = vadd.f32 %v317, %v538
        %v540 = vpop.f32.mrf.mxu0
        %v541 = vadd.f32 %v317, %v540
        %542 = vdwg.mxu0
        %v543 = vmax.f32 %v464, 0.0
        %v544 = vmax.f32 %v466, 0.0
        %v545 = vmax.f32 %v469, 0.0
        %v546 = vmax.f32 %v471, 0.0
        %v547 = vmax.f32 %v474, 0.0
        %v548 = vmax.f32 %v476, 0.0
        %v549 = vmax.f32 %v479, 0.0
        %v550 = vmax.f32 %v481, 0.0
        %v551 = vmax.f32 %v484, 0.0
        %v552 = vmax.f32 %v486, 0.0
        %v553 = vmax.f32 %v489, 0.0
        %v554 = vmax.f32 %v491, 0.0
        %v555 = vmax.f32 %v494, 0.0
        %v556 = vmax.f32 %v496, 0.0
        %v557 = vmax.f32 %v499, 0.0
        %v558 = vmax.f32 %v501, 0.0
        %v559 = vmax.f32 %v504, 0.0
        %v560 = vmax.f32 %v506, 0.0
        %v561 = vmax.f32 %v509, 0.0
        %v562 = vmax.f32 %v511, 0.0
        %v563 = vmax.f32 %v514, 0.0
        %v564 = vmax.f32 %v516, 0.0
        %v565 = vmax.f32 %v519, 0.0
        %v566 = vmax.f32 %v521, 0.0
        %v567 = vmax.f32 %v524, 0.0
        %v568 = vmax.f32 %v526, 0.0
        %v569 = vmax.f32 %v529, 0.0
        %v570 = vmax.f32 %v531, 0.0
        %v571 = vmax.f32 %v534, 0.0
        %v572 = vmax.f32 %v536, 0.0
        %v573 = vmax.f32 %v539, 0.0
        %v574 = vmax.f32 %v541, 0.0
        %v575 = vpack.c.bf16 %v544, %v543
        %v576 = vpack.c.bf16 %v546, %v545
        %v577 = vpack.c.bf16 %v548, %v547
        %v578 = vpack.c.bf16 %v550, %v549
        %v579 = vpack.c.bf16 %v552, %v551
        %v580 = vpack.c.bf16 %v554, %v553
        %v581 = vpack.c.bf16 %v556, %v555
        %v582 = vpack.c.bf16 %v558, %v557
        %v583 = vpack.c.bf16 %v560, %v559
        %v584 = vpack.c.bf16 %v562, %v561
        %v585 = vpack.c.bf16 %v564, %v563
        %v586 = vpack.c.bf16 %v566, %v565
        %v587 = vpack.c.bf16 %v568, %v567
        %v588 = vpack.c.bf16 %v570, %v569
        %v589 = vpack.c.bf16 %v572, %v571
        %v590 = vpack.c.bf16 %v574, %v573
        %v591 = vld [vmem:[%s3] sm:$0xf]
        %v592 = vld [vmem:[%s3 + $0x4] sm:$0xf]
        %v593 = vld [vmem:[%s3 + $0x8] sm:$0xf]
        %v594 = vld [vmem:[%s3 + $0xc] sm:$0xf]
        %v595 = vld [vmem:[%s4] sm:$0x1]
        %v597 = vperm.slane %v595, 0
        %v603 = vunpack.c.l.b16 %v591
        %v604 = vunpack.c.l.b16 %v592
        %v605 = vunpack.c.l.b16 %v593
        %v606 = vunpack.c.l.b16 %v594
        %v607 = vpack.c.b16 %v604, %v603
        %v608 = vpack.c.b16 %v606, %v605
        %vm611 = vcmask 261120
        %v613 = vsel %vm611, %v575, 0
        %v616 = vsel %vm611, %v576, 0
        %v619 = vsel %vm611, %v577, 0
        %v622 = vsel %vm611, %v578, 0
        %v625 = vsel %vm611, %v579, 0
        %v628 = vsel %vm611, %v580, 0
        %v631 = vsel %vm611, %v581, 0
        %v634 = vsel %vm611, %v582, 0
        %v637 = vsel %vm611, %v583, 0
        %v640 = vsel %vm611, %v584, 0
        %v643 = vsel %vm611, %v585, 0
        %v646 = vsel %vm611, %v586, 0
        %v649 = vsel %vm611, %v587, 0
        %v652 = vsel %vm611, %v588, 0
        %v655 = vsel %vm611, %v589, 0
        %v658 = vsel %vm611, %v590, 0
        %660 = vmatpush.bf16.msra.mxu0 0
        %661 = vmatpush.bf16.msra.mxu0 0
        %662 = vmatpush.bf16.msra.mxu0 0
        %663 = vmatpush.bf16.msra.mxu0 0
        %664 = vmatpush.bf16.msra.mxu0 0
        %665 = vmatpush.bf16.msra.mxu0 0
        %666 = vmatpush.bf16.msra.mxu0 %v608
        %667 = vmatpush.bf16.msra.mxu0 %v607
        %668 = vmatmul.bf16.gmra.mxu0 %v613
        %v669 = vpop.f32.mrf.mxu0
        %v670 = vadd.f32 %v597, %v669
        %v671 = vpop.f32.mrf.mxu0
        %v672 = vadd.f32 %v597, %v671
        %673 = vmatmul.bf16.gmra.mxu0 %v616
        %v674 = vpop.f32.mrf.mxu0
        %v675 = vadd.f32 %v597, %v674
        %v676 = vpop.f32.mrf.mxu0
        %v677 = vadd.f32 %v597, %v676
        %678 = vmatmul.bf16.gmra.mxu0 %v619
        %v679 = vpop.f32.mrf.mxu0
        %v680 = vadd.f32 %v597, %v679
        %v681 = vpop.f32.mrf.mxu0
        %v682 = vadd.f32 %v597, %v681
        %683 = vmatmul.bf16.gmra.mxu0 %v622
        %v684 = vpop.f32.mrf.mxu0
        %v685 = vadd.f32 %v597, %v684
        %v686 = vpop.f32.mrf.mxu0
        %v687 = vadd.f32 %v597, %v686
        %688 = vmatmul.bf16.gmra.mxu0 %v625
        %v689 = vpop.f32.mrf.mxu0
        %v690 = vadd.f32 %v597, %v689
        %v691 = vpop.f32.mrf.mxu0
        %v692 = vadd.f32 %v597, %v691
        %693 = vmatmul.bf16.gmra.mxu0 %v628
        %v694 = vpop.f32.mrf.mxu0
        %v695 = vadd.f32 %v597, %v694
        %v696 = vpop.f32.mrf.mxu0
        %v697 = vadd.f32 %v597, %v696
        %698 = vmatmul.bf16.gmra.mxu0 %v631
        %v699 = vpop.f32.mrf.mxu0
        %v700 = vadd.f32 %v597, %v699
        %v701 = vpop.f32.mrf.mxu0
        %v702 = vadd.f32 %v597, %v701
        %703 = vmatmul.bf16.gmra.mxu0 %v634
        %v704 = vpop.f32.mrf.mxu0
        %v705 = vadd.f32 %v597, %v704
        %v706 = vpop.f32.mrf.mxu0
        %v707 = vadd.f32 %v597, %v706
        %708 = vmatmul.bf16.gmra.mxu0 %v637
        %v709 = vpop.f32.mrf.mxu0
        %v710 = vadd.f32 %v597, %v709
        %v711 = vpop.f32.mrf.mxu0
        %v712 = vadd.f32 %v597, %v711
        %713 = vmatmul.bf16.gmra.mxu0 %v640
        %v714 = vpop.f32.mrf.mxu0
        %v715 = vadd.f32 %v597, %v714
        %v716 = vpop.f32.mrf.mxu0
        %v717 = vadd.f32 %v597, %v716
        %718 = vmatmul.bf16.gmra.mxu0 %v643
        %v719 = vpop.f32.mrf.mxu0
        %v720 = vadd.f32 %v597, %v719
        %v721 = vpop.f32.mrf.mxu0
        %v722 = vadd.f32 %v597, %v721
        %723 = vmatmul.bf16.gmra.mxu0 %v646
        %v724 = vpop.f32.mrf.mxu0
        %v725 = vadd.f32 %v597, %v724
        %v726 = vpop.f32.mrf.mxu0
        %v727 = vadd.f32 %v597, %v726
        %728 = vmatmul.bf16.gmra.mxu0 %v649
        %v729 = vpop.f32.mrf.mxu0
        %v730 = vadd.f32 %v597, %v729
        %v731 = vpop.f32.mrf.mxu0
        %v732 = vadd.f32 %v597, %v731
        %733 = vmatmul.bf16.gmra.mxu0 %v652
        %v734 = vpop.f32.mrf.mxu0
        %v735 = vadd.f32 %v597, %v734
        %v736 = vpop.f32.mrf.mxu0
        %v737 = vadd.f32 %v597, %v736
        %738 = vmatmul.bf16.gmra.mxu0 %v655
        %v739 = vpop.f32.mrf.mxu0
        %v740 = vadd.f32 %v597, %v739
        %v741 = vpop.f32.mrf.mxu0
        %v742 = vadd.f32 %v597, %v741
        %743 = vmatmul.bf16.gmra.mxu0 %v658
        %v744 = vpop.f32.mrf.mxu0
        %v745 = vadd.f32 %v597, %v744
        %v746 = vpop.f32.mrf.mxu0
        %v747 = vadd.f32 %v597, %v746
        %748 = vdwg.mxu0
        %v749 = vmax.f32 %v670, 0.0
        %v750 = vmax.f32 %v672, 0.0
        %v751 = vmax.f32 %v675, 0.0
        %v752 = vmax.f32 %v677, 0.0
        %v753 = vmax.f32 %v680, 0.0
        %v754 = vmax.f32 %v682, 0.0
        %v755 = vmax.f32 %v685, 0.0
        %v756 = vmax.f32 %v687, 0.0
        %v757 = vmax.f32 %v690, 0.0
        %v758 = vmax.f32 %v692, 0.0
        %v759 = vmax.f32 %v695, 0.0
        %v760 = vmax.f32 %v697, 0.0
        %v761 = vmax.f32 %v700, 0.0
        %v762 = vmax.f32 %v702, 0.0
        %v763 = vmax.f32 %v705, 0.0
        %v764 = vmax.f32 %v707, 0.0
        %v765 = vmax.f32 %v710, 0.0
        %v766 = vmax.f32 %v712, 0.0
        %v767 = vmax.f32 %v715, 0.0
        %v768 = vmax.f32 %v717, 0.0
        %v769 = vmax.f32 %v720, 0.0
        %v770 = vmax.f32 %v722, 0.0
        %v771 = vmax.f32 %v725, 0.0
        %v772 = vmax.f32 %v727, 0.0
        %v773 = vmax.f32 %v730, 0.0
        %v774 = vmax.f32 %v732, 0.0
        %v775 = vmax.f32 %v735, 0.0
        %v776 = vmax.f32 %v737, 0.0
        %v777 = vmax.f32 %v740, 0.0
        %v778 = vmax.f32 %v742, 0.0
        %v779 = vmax.f32 %v745, 0.0
        %v780 = vmax.f32 %v747, 0.0
        %v781 = vpack.c.bf16 %v750, %v749
        %v782 = vpack.c.bf16 %v752, %v751
        %v783 = vpack.c.bf16 %v754, %v753
        %v784 = vpack.c.bf16 %v756, %v755
        %v785 = vpack.c.bf16 %v758, %v757
        %v786 = vpack.c.bf16 %v760, %v759
        %v787 = vpack.c.bf16 %v762, %v761
        %v788 = vpack.c.bf16 %v764, %v763
        %v789 = vpack.c.bf16 %v766, %v765
        %v790 = vpack.c.bf16 %v768, %v767
        %v791 = vpack.c.bf16 %v770, %v769
        %v792 = vpack.c.bf16 %v772, %v771
        %v793 = vpack.c.bf16 %v774, %v773
        %v794 = vpack.c.bf16 %v776, %v775
        %v795 = vpack.c.bf16 %v778, %v777
        %v796 = vpack.c.bf16 %v780, %v779
        %v797 = vld [vmem:[%s5] sm:$0xf]
        %v798 = vld [vmem:[%s5 + $0x4] sm:$0xf]
        %v799 = vld [vmem:[%s5 + $0x8] sm:$0xf]
        %v800 = vld [vmem:[%s5 + $0xc] sm:$0xf]
        %v801 = vld [vmem:[%s6] sm:$0x1]
        %v803 = vperm.slane %v801, 0
        %v809 = vunpack.c.l.b16 %v797
        %v810 = vunpack.c.l.b16 %v798
        %v811 = vunpack.c.l.b16 %v799
        %v812 = vunpack.c.l.b16 %v800
        %v813 = vpack.c.b16 %v810, %v809
        %v814 = vpack.c.b16 %v812, %v811
        %v818 = vsel %vm611, %v781, 0
        %v821 = vsel %vm611, %v782, 0
        %v824 = vsel %vm611, %v783, 0
        %v827 = vsel %vm611, %v784, 0
        %v830 = vsel %vm611, %v785, 0
        %v833 = vsel %vm611, %v786, 0
        %v836 = vsel %vm611, %v787, 0
        %v839 = vsel %vm611, %v788, 0
        %v842 = vsel %vm611, %v789, 0
        %v845 = vsel %vm611, %v790, 0
        %v848 = vsel %vm611, %v791, 0
        %v851 = vsel %vm611, %v792, 0
        %v854 = vsel %vm611, %v793, 0
        %v857 = vsel %vm611, %v794, 0
        %v860 = vsel %vm611, %v795, 0
        %v863 = vsel %vm611, %v796, 0
        %865 = vmatpush.bf16.msra.mxu0 0
        %866 = vmatpush.bf16.msra.mxu0 0
        %867 = vmatpush.bf16.msra.mxu0 0
        %868 = vmatpush.bf16.msra.mxu0 0
        %869 = vmatpush.bf16.msra.mxu0 0
        %870 = vmatpush.bf16.msra.mxu0 0
        %871 = vmatpush.bf16.msra.mxu0 %v814
        %872 = vmatpush.bf16.msra.mxu0 %v813
        %873 = vmatmul.bf16.gmra.mxu0 %v818
        %v874 = vpop.f32.mrf.mxu0
        %v875 = vadd.f32 %v803, %v874
        %v876 = vpop.f32.mrf.mxu0
        %v877 = vadd.f32 %v803, %v876
        %878 = vmatmul.bf16.gmra.mxu0 %v821
        %v879 = vpop.f32.mrf.mxu0
        %v880 = vadd.f32 %v803, %v879
        %v881 = vpop.f32.mrf.mxu0
        %v882 = vadd.f32 %v803, %v881
        %883 = vmatmul.bf16.gmra.mxu0 %v824
        %v884 = vpop.f32.mrf.mxu0
        %v885 = vadd.f32 %v803, %v884
        %v886 = vpop.f32.mrf.mxu0
        %v887 = vadd.f32 %v803, %v886
        %888 = vmatmul.bf16.gmra.mxu0 %v827
        %v889 = vpop.f32.mrf.mxu0
        %v890 = vadd.f32 %v803, %v889
        %v891 = vpop.f32.mrf.mxu0
        %v892 = vadd.f32 %v803, %v891
        %893 = vmatmul.bf16.gmra.mxu0 %v830
        %v894 = vpop.f32.mrf.mxu0
        %v895 = vadd.f32 %v803, %v894
        %v896 = vpop.f32.mrf.mxu0
        %v897 = vadd.f32 %v803, %v896
        %898 = vmatmul.bf16.gmra.mxu0 %v833
        %v899 = vpop.f32.mrf.mxu0
        %v900 = vadd.f32 %v803, %v899
        %v901 = vpop.f32.mrf.mxu0
        %v902 = vadd.f32 %v803, %v901
        %903 = vmatmul.bf16.gmra.mxu0 %v836
        %v904 = vpop.f32.mrf.mxu0
        %v905 = vadd.f32 %v803, %v904
        %v906 = vpop.f32.mrf.mxu0
        %v907 = vadd.f32 %v803, %v906
        %908 = vmatmul.bf16.gmra.mxu0 %v839
        %v909 = vpop.f32.mrf.mxu0
        %v910 = vadd.f32 %v803, %v909
        %v911 = vpop.f32.mrf.mxu0
        %v912 = vadd.f32 %v803, %v911
        %913 = vmatmul.bf16.gmra.mxu0 %v842
        %v914 = vpop.f32.mrf.mxu0
        %v915 = vadd.f32 %v803, %v914
        %v916 = vpop.f32.mrf.mxu0
        %v917 = vadd.f32 %v803, %v916
        %918 = vmatmul.bf16.gmra.mxu0 %v845
        %v919 = vpop.f32.mrf.mxu0
        %v920 = vadd.f32 %v803, %v919
        %v921 = vpop.f32.mrf.mxu0
        %v922 = vadd.f32 %v803, %v921
        %923 = vmatmul.bf16.gmra.mxu0 %v848
        %v924 = vpop.f32.mrf.mxu0
        %v925 = vadd.f32 %v803, %v924
        %v926 = vpop.f32.mrf.mxu0
        %v927 = vadd.f32 %v803, %v926
        %928 = vmatmul.bf16.gmra.mxu0 %v851
        %v929 = vpop.f32.mrf.mxu0
        %v930 = vadd.f32 %v803, %v929
        %v931 = vpop.f32.mrf.mxu0
        %v932 = vadd.f32 %v803, %v931
        %933 = vmatmul.bf16.gmra.mxu0 %v854
        %v934 = vpop.f32.mrf.mxu0
        %v935 = vadd.f32 %v803, %v934
        %v936 = vpop.f32.mrf.mxu0
        %v937 = vadd.f32 %v803, %v936
        %938 = vmatmul.bf16.gmra.mxu0 %v857
        %v939 = vpop.f32.mrf.mxu0
        %v940 = vadd.f32 %v803, %v939
        %v941 = vpop.f32.mrf.mxu0
        %v942 = vadd.f32 %v803, %v941
        %943 = vmatmul.bf16.gmra.mxu0 %v860
        %v944 = vpop.f32.mrf.mxu0
        %v945 = vadd.f32 %v803, %v944
        %v946 = vpop.f32.mrf.mxu0
        %v947 = vadd.f32 %v803, %v946
        %948 = vmatmul.bf16.gmra.mxu0 %v863
        %v949 = vpop.f32.mrf.mxu0
        %v950 = vadd.f32 %v803, %v949
        %v951 = vpop.f32.mrf.mxu0
        %v952 = vadd.f32 %v803, %v951
        %953 = vdwg.mxu0
        %v954 = vpack.c.bf16 %v875, %v875
        %v955 = vpack.c.bf16 %v877, %v877
        %v956 = vpack.c.bf16 %v880, %v880
        %v957 = vpack.c.bf16 %v882, %v882
        %v958 = vpack.c.bf16 %v885, %v885
        %v959 = vpack.c.bf16 %v887, %v887
        %v960 = vpack.c.bf16 %v890, %v890
        %v961 = vpack.c.bf16 %v892, %v892
        %v962 = vpack.c.bf16 %v895, %v895
        %v963 = vpack.c.bf16 %v897, %v897
        %v964 = vpack.c.bf16 %v900, %v900
        %v965 = vpack.c.bf16 %v902, %v902
        %v966 = vpack.c.bf16 %v905, %v905
        %v967 = vpack.c.bf16 %v907, %v907
        %v968 = vpack.c.bf16 %v910, %v910
        %v969 = vpack.c.bf16 %v912, %v912
        %v970 = vpack.c.bf16 %v915, %v915
        %v971 = vpack.c.bf16 %v917, %v917
        %v972 = vpack.c.bf16 %v920, %v920
        %v973 = vpack.c.bf16 %v922, %v922
        %v974 = vpack.c.bf16 %v925, %v925
        %v975 = vpack.c.bf16 %v927, %v927
        %v976 = vpack.c.bf16 %v930, %v930
        %v977 = vpack.c.bf16 %v932, %v932
        %v978 = vpack.c.bf16 %v935, %v935
        %v979 = vpack.c.bf16 %v937, %v937
        %v980 = vpack.c.bf16 %v940, %v940
        %v981 = vpack.c.bf16 %v942, %v942
        %v982 = vpack.c.bf16 %v945, %v945
        %v983 = vpack.c.bf16 %v947, %v947
        %v984 = vpack.c.bf16 %v950, %v950
        %v985 = vpack.c.bf16 %v952, %v952
        %986 = vst [vmem:[%s272] sm:$0xf] %v954
        %987 = vst [vmem:[%s272 + $0x4] sm:$0xf] %v955
        %988 = vst [vmem:[%s272 + $0x8] sm:$0xf] %v956
        %989 = vst [vmem:[%s272 + $0xc] sm:$0xf] %v957
        %990 = vst [vmem:[%s272 + $0x10] sm:$0xf] %v958
        %991 = vst [vmem:[%s272 + $0x14] sm:$0xf] %v959
        %992 = vst [vmem:[%s272 + $0x18] sm:$0xf] %v960
        %993 = vst [vmem:[%s272 + $0x1c] sm:$0xf] %v961
        %994 = vst [vmem:[%s272 + $0x20] sm:$0xf] %v962
        %995 = vst [vmem:[%s272 + $0x24] sm:$0xf] %v963
        %996 = vst [vmem:[%s272 + $0x28] sm:$0xf] %v964
        %997 = vst [vmem:[%s272 + $0x2c] sm:$0xf] %v965
        %998 = vst [vmem:[%s272 + $0x30] sm:$0xf] %v966
        %999 = vst [vmem:[%s272 + $0x34] sm:$0xf] %v967
        %1000 = vst [vmem:[%s272 + $0x38] sm:$0xf] %v968
        %1001 = vst [vmem:[%s272 + $0x3c] sm:$0xf] %v969
        %1002 = vst [vmem:[%s272 + $0x40] sm:$0xf] %v970
        %1003 = vst [vmem:[%s272 + $0x44] sm:$0xf] %v971
        %1004 = vst [vmem:[%s272 + $0x48] sm:$0xf] %v972
        %1005 = vst [vmem:[%s272 + $0x4c] sm:$0xf] %v973
        %1006 = vst [vmem:[%s272 + $0x50] sm:$0xf] %v974
        %1007 = vst [vmem:[%s272 + $0x54] sm:$0xf] %v975
        %1008 = vst [vmem:[%s272 + $0x58] sm:$0xf] %v976
        %1009 = vst [vmem:[%s272 + $0x5c] sm:$0xf] %v977
        %1010 = vst [vmem:[%s272 + $0x60] sm:$0xf] %v978
        %1011 = vst [vmem:[%s272 + $0x64] sm:$0xf] %v979
        %1012 = vst [vmem:[%s272 + $0x68] sm:$0xf] %v980
        %1013 = vst [vmem:[%s272 + $0x6c] sm:$0xf] %v981
        %1014 = vst [vmem:[%s272 + $0x70] sm:$0xf] %v982
        %1015 = vst [vmem:[%s272 + $0x74] sm:$0xf] %v983
        %1016 = vst [vmem:[%s272 + $0x78] sm:$0xf] %v984
        %1017 = vst [vmem:[%s272 + $0x7c] sm:$0xf] %v985
        %s1018 = sand.u32 %s181, 1
        %s1019 = scalar_lea.sflag [#allocation3], %s1018
        %s1020 = sand.u32 %s181, 1
        %s1021 = smul.addr %s1020, 128
        %s1022 = scalar_lea.vmem [#allocation2], %s1021
        // Predicated region
        $region49: #{tpu_custom_call.1} parent=47 // pred_check
          %p1023 = pneg %p191
        $region50: #{tpu_custom_call.1} parent=47 // pred_check_branch
          %1025 = sbr.rel (%p1023) target = $region52
        $region51: #{tpu_custom_call.1} parent=47 // pred_region
          %s1026 = smul.u32 32, %s21
          %1028 = vsyncadd %s1019, 0
          %s1029 = smul.addr %s1026, 4
          %s1030 = scalar_lea.hbm %s7, %s1029
          %s1031 = sshll.u32 %s1022, 4
          %s1032 = int_to_ptr.vmem [resolvable:$true] %s1031
          %s1033 = sshll.u32 %s1030, 4
          %s1034 = int_to_ptr.hbm [resolvable:$true] %s1033
          %1039 = dma.vmem_to_hbm [thread:$0]  %s1032, 2048, %s1034, %s1019, 64, 64, 4
        $region52: #{tpu_custom_call.1} parent=47 // pred_fallthru
          _
      $region48: #{tpu_custom_call.1} parent=5 // pred_fallthru
        _
      %p1040 = scmp.le.s32.totalorder 2, %s16
      // Predicated region
      $region53: #{tpu_custom_call.1} parent=5 // pred_check
        %p1041 = pneg %p1040
      $region54: #{tpu_custom_call.1} parent=5 // pred_check_branch
        %1043 = sbr.rel (%p1041) target = $region56
      $region55: #{tpu_custom_call.1} parent=5 // pred_region
        %s1044 = ssub.s32 %s16, 2
        // Predicated region
        $region57: #{tpu_custom_call.1} parent=55 // pred_check
          %p1045 = pneg %p197
        $region58: #{tpu_custom_call.1} parent=55 // pred_check_branch
          %1047 = sbr.rel (%p1045) target = $region60
        $region59: #{tpu_custom_call.1} parent=55 // pred_region
          %s1048 = sand.u32 %s182, 1
          %s1049 = scalar_lea.sflag [#allocation3], %s1048
          %s1050 = sand.u32 %s182, 1
          %s1051 = smul.addr %s1050, 128
          %s1052 = scalar_lea.vmem [#allocation2], %s1051
          %1054 = dma.done %s1049, 2048
        $region60: #{tpu_custom_call.1} parent=55 // pred_fallthru
          _
      $region56: #{tpu_custom_call.1} parent=5 // pred_fallthru
        _
    $region6: #{tpu_custom_call.1} parent=1 // loop_footer
      %s20 = sadd.s32 1, %s16
    $region7: #{tpu_custom_call.1} parent=1 // loop_footer_branch
      %15 = sbr.rel target = $region3
    $region8: #{tpu_custom_call.1} parent=1 // loop_exit
      _
    %1055 = vsyncpa [#allocation3], 1
    %s1056 = scalar_lea.sflag [#allocation3], 1
    %1057 = vsyncpa %s1056, 1

</llo_original>
